<compile_context>
chip_gen: v7x
topology: tpu7x:2x2x1
jax: 0.10.0
libtpu: 0.0.40
codegen_flags: <defaults>
</compile_context>

<pallas_src>
import jax
import jax.numpy as jnp
from jax import lax
from jax.experimental import pallas as pl
from jax.experimental.pallas import tpu as pltpu


def _attn_kernel(scale_ref, q_ref, k_ref, v_ref, o_ref):
    # Blocks are (G, L, D); no up-cast (inputs feed the MXU natively with
    # f32 accumulation via preferred_element_type).
    q = q_ref[...]            # (G, Lq, D)
    k = k_ref[...]            # (G, Lk, D)
    v = v_ref[...]            # (G, Lk, D)

    # Fold the per-key L2 norm into k's rows (O(Lk*D) instead of O(Lq*Lk)).
    k_norm = jnp.sqrt(jnp.sum(k * k, axis=2, keepdims=True))       # (G, Lk, 1)
    k_n = k * (1.0 / (k_norm + 1e-9))                               # (G, Lk, D)

    # W[g] = k_n[g]^T @ v[g]  -> (G, D, D); contraction over Lk on the MXU,
    # no explicit transpose materialized.
    w = lax.dot_general(
        k_n, v,
        dimension_numbers=(((1,), (1,)), ((0,), (0,))),
        preferred_element_type=jnp.float32)

    # out[g] = (s * q[g]) @ W[g]  -> (G, Lq, D).  s folds temperature and the
    # global Frobenius q-norm into a single SMEM scalar.
    s = scale_ref[0]
    out = lax.dot_general(
        q * s, w,
        dimension_numbers=(((2,), (1,)), ((0,), (0,))),
        preferred_element_type=jnp.float32)

    o_ref[...] = out.astype(o_ref.dtype)


def _ws_bytes(g, lq, lk, d, itemsize):
    """Rough per-grid-step VMEM working set (double-buffered I/O + f32 temps)."""
    io = 2 * g * (2 * lq * d + 2 * lk * d) * itemsize       # q, k, v, out (x2 buffers)
    tmp = g * (lk * d + d * d + lq * d) * 4                  # k_n, W, out accumulator
    return io + tmp


def scaled_dot_product_attention(q, k, v, temperature, *, heads_per_block=None):
    """q,k,v: [B, H, L, D].  Returns [B, H, Lq, D]."""
    B, H, Lq, D = q.shape
    Lk = k.shape[2]
    BH = B * H
    itemsize = jnp.dtype(q.dtype).itemsize

    qf = q.reshape(BH, Lq, D)
    kf = k.reshape(BH, Lk, D)
    vf = v.reshape(BH, Lk, D)

    # Global Frobenius norm of q; fold temperature + epsilon into one scalar.
    q_norm = jnp.sqrt(jnp.sum(jnp.square(q.astype(jnp.float32))))
    scale = (1.0 / (temperature * (q_norm + 1e-9))).astype(jnp.float32).reshape(1)

    # Choose how many heads to batch per grid step: largest divisor of B*H that
    # fits the VMEM budget, preferring a grid extent >= 2 (v7x has 2 TCs).
    if heads_per_block is None:
        budget = 20 * 1024 * 1024
        divisors = [g for g in range(1, BH + 1) if BH % g == 0]
        fitting = [g for g in divisors
                   if _ws_bytes(g, Lq, Lk, D, itemsize) <= budget] or [1]
        multi = [g for g in fitting if BH // g >= 2]
        heads_per_block = max(multi) if multi else max(fitting)
    G = heads_per_block
    assert BH % G == 0, "heads_per_block must divide B*H"
    num_blocks = BH // G

    out = pl.pallas_call(
        _attn_kernel,
        out_shape=jax.ShapeDtypeStruct((BH, Lq, D), q.dtype),
        grid_spec=pltpu.PrefetchScalarGridSpec(
            num_scalar_prefetch=0,
            grid=(num_blocks,),
            in_specs=[
                pl.BlockSpec(memory_space=pltpu.MemorySpace.SMEM),   # folded scalar
                pl.BlockSpec((G, Lq, D), lambda b: (b, 0, 0)),       # q heads
                pl.BlockSpec((G, Lk, D), lambda b: (b, 0, 0)),       # k heads
                pl.BlockSpec((G, Lk, D), lambda b: (b, 0, 0)),       # v heads
            ],
            out_specs=pl.BlockSpec((G, Lq, D), lambda b: (b, 0, 0)),
        ),
        compiler_params=pltpu.CompilerParams(
            dimension_semantics=("parallel",),
            vmem_limit_bytes=48 * 1024 * 1024,   # explicit: safe on v5e/v6e/v7x
        ),
    )(scale, qf, kf, vf)

    return out.reshape(B, H, Lq, D)


def _reference(q, k, v, temperature):
    """Plain-JAX reference mirroring the PyTorch module."""
    attn = jnp.matmul(q / temperature, jnp.swapaxes(k, 2, 3))
    k_norm = jnp.linalg.norm(k, axis=3, keepdims=True)          # [B,H,Lk,1]
    q_norm = jnp.linalg.norm(q)                                  # scalar
    attn = attn / (jnp.swapaxes(k_norm, 2, 3) + 1e-9) / (q_norm + 1e-9)
    return jnp.matmul(attn, v)


if __name__ == "__main__":
    key = jax.random.PRNGKey(0)
    kq, kk, kv = jax.random.split(key, 3)

    B, H, L, D = 2, 2, 8, 32
    temperature = float(D) ** 0.5

    q = jax.random.normal(kq, (B, H, L, D), dtype=jnp.float32)
    k = jax.random.normal(kk, (B, H, L, D), dtype=jnp.float32)
    v = jax.random.normal(kv, (B, H, L, D), dtype=jnp.float32)

    out = scaled_dot_product_attention(q, k, v, temperature)
    out = jax.block_until_ready(out)

    ref = _reference(q, k, v, temperature)
    assert out.shape == (B, H, L, D)
    assert jnp.allclose(out, ref, atol=1e-5, rtol=1e-5), "mismatch vs reference"

    print("KERNEL_OK")
</pallas_src>

<mosaic_0001>
module attributes {stable_mosaic.version = 11 : i64} {
  func.func @_attn_kernel(%arg0: i32, %arg1: memref<1xf32, #tpu.memory_space<smem>>, %arg2: memref<2x8x32xf32, #tpu.memory_space<vmem>>, %arg3: memref<2x8x32xf32, #tpu.memory_space<vmem>>, %arg4: memref<2x8x32xf32, #tpu.memory_space<vmem>>, %arg5: memref<2x8x32xf32, #tpu.memory_space<vmem>>) attributes {dimension_semantics = [#tpu.dimension_semantics<parallel>], iteration_bounds = array<i64: 2>, scalar_prefetch = 0 : i64, scratch_operands = 0 : i64, tpu.core_type = #tpu.core_type<tc>, window_params = [{transform_indices = @transform_0, window_bounds = array<i64: 1>}, {transform_indices = @transform_1, window_bounds = array<i64: 2, 8, 32>}, {transform_indices = @transform_2, window_bounds = array<i64: 2, 8, 32>}, {transform_indices = @transform_3, window_bounds = array<i64: 2, 8, 32>}, {transform_indices = @transform_4, window_bounds = array<i64: 2, 8, 32>}]} {
    %c0 = arith.constant 0 : index
    %c0_0 = arith.constant 0 : index
    %c0_1 = arith.constant 0 : index
    %0 = vector.load %arg2[%c0, %c0_0, %c0_1] : memref<2x8x32xf32, #tpu.memory_space<vmem>>, vector<2x8x32xf32>
    %c0_2 = arith.constant 0 : index
    %c0_3 = arith.constant 0 : index
    %c0_4 = arith.constant 0 : index
    %1 = vector.load %arg3[%c0_2, %c0_3, %c0_4] : memref<2x8x32xf32, #tpu.memory_space<vmem>>, vector<2x8x32xf32>
    %c0_5 = arith.constant 0 : index
    %c0_6 = arith.constant 0 : index
    %c0_7 = arith.constant 0 : index
    %2 = vector.load %arg4[%c0_5, %c0_6, %c0_7] : memref<2x8x32xf32, #tpu.memory_space<vmem>>, vector<2x8x32xf32>
    %3 = arith.mulf %1, %1 : vector<2x8x32xf32>
    %cst = arith.constant dense<0.000000e+00> : vector<2x8xf32>
    %4 = vector.multi_reduction <add>, %3, %cst [2] : vector<2x8x32xf32> to vector<2x8xf32>
    %5 = vector.shape_cast %4 : vector<2x8xf32> to vector<2x8x1xf32>
    %6 = math.sqrt %5 : vector<2x8x1xf32>
    %cst_8 = arith.constant 9.99999971E-10 : f32
    %7 = vector.broadcast %cst_8 : f32 to vector<2x8x1xf32>
    %8 = arith.addf %6, %7 : vector<2x8x1xf32>
    %cst_9 = arith.constant 1.000000e+00 : f32
    %9 = vector.broadcast %cst_9 : f32 to vector<2x8x1xf32>
    %10 = arith.divf %9, %8 : vector<2x8x1xf32>
    %11 = vector.broadcast %10 : vector<2x8x1xf32> to vector<2x8x32xf32>
    %12 = arith.mulf %1, %11 : vector<2x8x32xf32>
    %cst_10 = arith.constant dense<0.000000e+00> : vector<2x32x32xf32>
    %13 = tpu.matmul %12, %2, %cst_10 {dimension_numbers = #tpu.dot_dimension_numbers<[1], [1], [2], [2], [0, 0, 0, 2, 1, 2], [0], [0]>} : vector<2x8x32xf32>, vector<2x8x32xf32>, vector<2x32x32xf32> -> vector<2x32x32xf32>
    %c0_11 = arith.constant 0 : index
    %14 = memref.load %arg1[%c0_11] : memref<1xf32, #tpu.memory_space<smem>>
    %15 = vector.broadcast %14 : f32 to vector<2x8x32xf32>
    %16 = arith.mulf %0, %15 : vector<2x8x32xf32>
    %cst_12 = arith.constant dense<0.000000e+00> : vector<2x8x32xf32>
    %17 = tpu.matmul %16, %13, %cst_12 {dimension_numbers = #tpu.dot_dimension_numbers<[2], [1], [1], [2], [0, 0, 0, 1, 1, 2], [0], [0]>} : vector<2x8x32xf32>, vector<2x32x32xf32>, vector<2x8x32xf32> -> vector<2x8x32xf32>
    %c0_13 = arith.constant 0 : index
    %c0_14 = arith.constant 0 : index
    %c0_15 = arith.constant 0 : index
    %18 = vector.load %arg5[%c0_13, %c0_14, %c0_15] : memref<2x8x32xf32, #tpu.memory_space<vmem>>, vector<2x8x32xf32>
    tpu.vector_store %arg5[%c0_13, %c0_14, %c0_15], %17 {strides = array<i32>} : memref<2x8x32xf32, #tpu.memory_space<vmem>>, vector<2x8x32xf32>,
    return
  }
  func.func @transform_0(%arg0: i32) -> i32 {
    %c0_i32 = arith.constant 0 : i32
    %c0_i32_0 = arith.constant 0 : i32
    return %c0_i32 : i32
  }
  func.func @transform_1(%arg0: i32) -> (i32, i32, i32) {
    %c0_i32 = arith.constant 0 : i32
    %c0_i32_0 = arith.constant 0 : i32
    %c0_i32_1 = arith.constant 0 : i32
    return %arg0, %c0_i32, %c0_i32_0 : i32, i32, i32
  }
  func.func @transform_2(%arg0: i32) -> (i32, i32, i32) {
    %c0_i32 = arith.constant 0 : i32
    %c0_i32_0 = arith.constant 0 : i32
    %c0_i32_1 = arith.constant 0 : i32
    return %arg0, %c0_i32, %c0_i32_0 : i32, i32, i32
  }
  func.func @transform_3(%arg0: i32) -> (i32, i32, i32) {
    %c0_i32 = arith.constant 0 : i32
    %c0_i32_0 = arith.constant 0 : i32
    %c0_i32_1 = arith.constant 0 : i32
    return %arg0, %c0_i32, %c0_i32_0 : i32, i32, i32
  }
  func.func @transform_4(%arg0: i32) -> (i32, i32, i32) {
    %c0_i32 = arith.constant 0 : i32
    %c0_i32_0 = arith.constant 0 : i32
    %c0_i32_1 = arith.constant 0 : i32
    return %arg0, %c0_i32, %c0_i32_0 : i32, i32, i32
  }
}

</mosaic_0001>

<llo_original>
// kernel: tpu_custom_call.1
$region0: #{tpu_custom_call.1}
  #allocation0 [shape = 'u32[]', space=smem, size = 0x4, offset = 0x4, fixed_abs, tag = 'smem constant byte address 0x4 - core index']
  #allocation1 [shape = 'u32[144,128]{1,0:T(1,128)}', space=vmem, size = 0x12000, scoped, tag = 'internal scratch']
  #allocation2 [shape = 'f32[1]{0:T(128)S(6)}', space=smem, size = 0x200, scoped, tag = 'scoped memory for tpu_custom_call.1']
  %s0 = inlined_call_operand.<no memory space> [shape: f32[1], index: 0, kind: input, shape index: {}]
  %s1 = inlined_call_operand.hbm [shape: f32[4,8,32], index: 1, kind: input, shape index: {}]
  %s2 = inlined_call_operand.hbm [shape: f32[4,8,32], index: 2, kind: input, shape index: {}]
  %s3 = inlined_call_operand.hbm [shape: f32[4,8,32], index: 3, kind: input, shape index: {}]
  %s4 = inlined_call_operand.hbm [shape: f32[4,8,32], index: 4, kind: output, shape index: {}]
  %s5 = sld [smem:[#allocation0]]
  $region61: #{tpu_custom_call.1} parent=0
    _
  %s7 = ssub.s32 1, %s5
  %s8 = scalar_select 0, %s7, %s5
  %9 = sst [smem:[#allocation2]] %s0
  $region1: #{tpu_custom_call.1} parent=0
    #allocation3 [shape = 'u8[16384]{0}', space=vmem, size = 0x4000, scoped, tag = 'input window, operand 1']
    #allocation4 [shape = 's32[2]{0}', space=sflag, size = 0x8, scoped, tag = 'scoped memory for tpu_custom_call.1']
    #allocation5 [shape = 's32[2]{0}', space=sflag, size = 0x8, scoped, tag = 'scoped memory for tpu_custom_call.1']
    #allocation6 [shape = 'u8[16384]{0}', space=vmem, size = 0x4000, scoped, tag = 'input window, operand 2']
    #allocation7 [shape = 's32[2]{0}', space=sflag, size = 0x8, scoped, tag = 'scoped memory for tpu_custom_call.1']
    #allocation8 [shape = 'u8[16384]{0}', space=vmem, size = 0x4000, scoped, tag = 'input window, operand 3']
    #allocation9 [shape = 'u8[16384]{0}', space=vmem, size = 0x4000, scoped, tag = 'output window, operand 0']
    %10 = vsyncpa [#allocation4], 0
    %s11 = scalar_lea.sflag [#allocation4], 1
    %12 = vsyncpa %s11, 0
    %13 = vsyncpa [#allocation7], 0
    %s14 = scalar_lea.sflag [#allocation7], 1
    %15 = vsyncpa %s14, 0
    %16 = vsyncpa [#allocation5], 0
    %s17 = scalar_lea.sflag [#allocation5], 1
    %18 = vsyncpa %s17, 0
    loop: start=0, step=1, limit=4
    $region2: #{tpu_custom_call.1} parent=1 // loop_pre_header
      _
    $region3: #{tpu_custom_call.1} parent=1 // loop_header
      %s20 = sphi 0, %s24
      %p21 = scmp.ge.s32.totalorder %s20, 4
      %s28 = sphi 0, %s28
      %s30 = sphi 0, %s28
      %s31 = sphi 0, %s30
      %s45 = sphi 0, %s31
      %s51 = sphi 0, %s53
      %s54 = sphi 0, %s51
      %s55 = sphi 0, %s54
      %s71 = sphi 0, %s55
      %s77 = sphi 0, %s79
      %s80 = sphi 0, %s77
      %s81 = sphi 0, %s80
      %s97 = sphi 0, %s81
      %s103 = sphi 0, %s105
      %s106 = sphi 0, %s103
      %s107 = sphi 0, %s106
      %s123 = sphi 0, %s107
      %s129 = sphi 0, %s131
      %s132 = sphi 0, %s129
      %s133 = sphi 0, %s132
      %s149 = sphi 0, %s133
    $region4: #{tpu_custom_call.1} parent=1 // loop_header_branch
      %23 = sbr.rel (%p21) target = $region8
    $region5: #{tpu_custom_call.1} parent=1 // loop_body
      %s25 = ssub.s32 %s20, 1
      %s26 = ssub.s32 %s20, 2
      %s27 = sadd.s32 %s20, 1
      %s29 = sadd.s32 %s28, 1
      %p32 = scmp.eq.s32.totalorder %s20, 1
      %p33 = scmp.ne.s32.totalorder %s28, %s30
      %p34 = scmp.eq.s32.totalorder %s20, 0
      %p35 = por %p33, %p34
      %p36 = scmp.ne.s32.totalorder %s28, %s30
      %p37 = scmp.eq.s32.totalorder %s25, 1
      %p38 = por %p36, %p37
      %p39 = scmp.ne.s32.totalorder %s30, %s31
      %p40 = scmp.eq.s32.totalorder %s25, 0
      %p41 = por %p39, %p40
      %p42 = scmp.ne.s32.totalorder %s30, %s31
      %p43 = scmp.eq.s32.totalorder %s26, 1
      %p44 = por %p42, %p43
      %p46 = scmp.ne.s32.totalorder %s31, %s45
      %p47 = scmp.eq.s32.totalorder %s26, 0
      %p48 = por %p46, %p47
      %s49 = ssub.s32 %s20, %s27
      %p50 = scmp.eq.s32.totalorder %s49, 0
      %s52 = sadd.s32 %s51, 1
      %s53 = scalar_select %p50, %s51, %s52
      %p56 = pneg %p50
      %p57 = scmp.eq.s32.totalorder %s20, 1
      %p58 = por %p56, %p57
      %p59 = scmp.ne.s32.totalorder %s51, %s54
      %p60 = scmp.eq.s32.totalorder %s20, 0
      %p61 = por %p59, %p60
      %p62 = scmp.ne.s32.totalorder %s51, %s54
      %p63 = scmp.eq.s32.totalorder %s25, 1
      %p64 = por %p62, %p63
      %p65 = scmp.ne.s32.totalorder %s54, %s55
      %p66 = scmp.eq.s32.totalorder %s25, 0
      %p67 = por %p65, %p66
      %p68 = scmp.ne.s32.totalorder %s54, %s55
      %p69 = scmp.eq.s32.totalorder %s26, 1
      %p70 = por %p68, %p69
      %p72 = scmp.ne.s32.totalorder %s55, %s71
      %p73 = scmp.eq.s32.totalorder %s26, 0
      %p74 = por %p72, %p73
      %s75 = ssub.s32 %s20, %s27
      %p76 = scmp.eq.s32.totalorder %s75, 0
      %s78 = sadd.s32 %s77, 1
      %s79 = scalar_select %p76, %s77, %s78
      %p82 = pneg %p76
      %p83 = scmp.eq.s32.totalorder %s20, 1
      %p84 = por %p82, %p83
      %p85 = scmp.ne.s32.totalorder %s77, %s80
      %p86 = scmp.eq.s32.totalorder %s20, 0
      %p87 = por %p85, %p86
      %p88 = scmp.ne.s32.totalorder %s77, %s80
      %p89 = scmp.eq.s32.totalorder %s25, 1
      %p90 = por %p88, %p89
      %p91 = scmp.ne.s32.totalorder %s80, %s81
      %p92 = scmp.eq.s32.totalorder %s25, 0
      %p93 = por %p91, %p92
      %p94 = scmp.ne.s32.totalorder %s80, %s81
      %p95 = scmp.eq.s32.totalorder %s26, 1
      %p96 = por %p94, %p95
      %p98 = scmp.ne.s32.totalorder %s81, %s97
      %p99 = scmp.eq.s32.totalorder %s26, 0
      %p100 = por %p98, %p99
      %s101 = ssub.s32 %s20, %s27
      %p102 = scmp.eq.s32.totalorder %s101, 0
      %s104 = sadd.s32 %s103, 1
      %s105 = scalar_select %p102, %s103, %s104
      %p108 = pneg %p102
      %p109 = scmp.eq.s32.totalorder %s20, 1
      %p110 = por %p108, %p109
      %p111 = scmp.ne.s32.totalorder %s103, %s106
      %p112 = scmp.eq.s32.totalorder %s20, 0
      %p113 = por %p111, %p112
      %p114 = scmp.ne.s32.totalorder %s103, %s106
      %p115 = scmp.eq.s32.totalorder %s25, 1
      %p116 = por %p114, %p115
      %p117 = scmp.ne.s32.totalorder %s106, %s107
      %p118 = scmp.eq.s32.totalorder %s25, 0
      %p119 = por %p117, %p118
      %p120 = scmp.ne.s32.totalorder %s106, %s107
      %p121 = scmp.eq.s32.totalorder %s26, 1
      %p122 = por %p120, %p121
      %p124 = scmp.ne.s32.totalorder %s107, %s123
      %p125 = scmp.eq.s32.totalorder %s26, 0
      %p126 = por %p124, %p125
      %s127 = ssub.s32 %s20, %s27
      %p128 = scmp.eq.s32.totalorder %s127, 0
      %s130 = sadd.s32 %s129, 1
      %s131 = scalar_select %p128, %s129, %s130
      %p134 = pneg %p128
      %p135 = scmp.eq.s32.totalorder %s20, 1
      %p136 = por %p134, %p135
      %p137 = scmp.ne.s32.totalorder %s129, %s132
      %p138 = scmp.eq.s32.totalorder %s20, 0
      %p139 = por %p137, %p138
      %p140 = scmp.ne.s32.totalorder %s129, %s132
      %p141 = scmp.eq.s32.totalorder %s25, 1
      %p142 = por %p140, %p141
      %p143 = scmp.ne.s32.totalorder %s132, %s133
      %p144 = scmp.eq.s32.totalorder %s25, 0
      %p145 = por %p143, %p144
      %p146 = scmp.ne.s32.totalorder %s132, %s133
      %p147 = scmp.eq.s32.totalorder %s26, 1
      %p148 = por %p146, %p147
      %p150 = scmp.ne.s32.totalorder %s133, %s149
      %p151 = scmp.eq.s32.totalorder %s26, 0
      %p152 = por %p150, %p151
      %p153 = scmp.le.s32.totalorder 1, %s20
      %p154 = scmp.lt.s32.totalorder %s20, 3
      %p155 = pnand %p153, %p154
      %p156 = pneg %p155
      // Predicated region
      $region9: #{tpu_custom_call.1} parent=5 // pred_check
        _
      $region10: #{tpu_custom_call.1} parent=5 // pred_check_branch
        %158 = sbr.rel (%p155) target = $region12
      $region11: #{tpu_custom_call.1} parent=5 // pred_region
        %s159 = ssub.s32 %s20, 1
        // Predicated region
        $region13: #{tpu_custom_call.1} parent=11 // pred_check
          %p160 = pneg %p41
        $region14: #{tpu_custom_call.1} parent=11 // pred_check_branch
          %162 = sbr.rel (%p160) target = $region16
        $region15: #{tpu_custom_call.1} parent=11 // pred_region
          _
        $region16: #{tpu_custom_call.1} parent=11 // pred_fallthru
          _
      $region12: #{tpu_custom_call.1} parent=5 // pred_fallthru
        _
      %p163 = scmp.lt.s32.totalorder %s20, 2
      // Predicated region
      $region17: #{tpu_custom_call.1} parent=5 // pred_check
        %p164 = pneg %p163
      $region18: #{tpu_custom_call.1} parent=5 // pred_check_branch
        %166 = sbr.rel (%p164) target = $region20
      $region19: #{tpu_custom_call.1} parent=5 // pred_region
        // Predicated region
        $region21: #{tpu_custom_call.1} parent=19 // pred_check
          %p167 = pneg %p61
        $region22: #{tpu_custom_call.1} parent=19 // pred_check_branch
          %169 = sbr.rel (%p167) target = $region24
        $region23: #{tpu_custom_call.1} parent=19 // pred_region
          %s170 = sand.u32 %s51, 1
          %s171 = scalar_lea.sflag [#allocation4], %s170
          %s172 = sand.u32 %s51, 1
          %s173 = smul.addr %s172, 16
          %s174 = scalar_lea.vmem [#allocation3], %s173
          %s175 = smul.u32 2, %s20
          %s177 = ssub.s32 256, 256
          %178 = vsyncadd %s171, %s177
          %s179 = smul.addr %s175, 128
          %s180 = scalar_lea.hbm %s1, %s179
          %s181 = sshll.u32 %s174, 4
          %s182 = int_to_ptr.vmem [resolvable:$true] %s181
          %187 = dma.hbm_to_vmem [thread:$0]  %s180, 256, %s182, %s171, 128, 128, 8
        $region24: #{tpu_custom_call.1} parent=19 // pred_fallthru
          _
        // Predicated region
        $region25: #{tpu_custom_call.1} parent=19 // pred_check
          %p188 = pneg %p87
        $region26: #{tpu_custom_call.1} parent=19 // pred_check_branch
          %190 = sbr.rel (%p188) target = $region28
        $region27: #{tpu_custom_call.1} parent=19 // pred_region
          %s191 = sand.u32 %s20, 1
          %s192 = scalar_lea.sflag [#allocation7], %s191
          %s193 = sand.u32 %s77, 1
          %s194 = smul.addr %s193, 16
          %s195 = scalar_lea.vmem [#allocation6], %s194
          %s196 = smul.u32 2, %s20
          %s198 = ssub.s32 256, 256
          %199 = vsyncadd %s192, %s198
          %s200 = smul.addr %s196, 128
          %s201 = scalar_lea.hbm %s2, %s200
          %s202 = sshll.u32 %s195, 4
          %s203 = int_to_ptr.vmem [resolvable:$true] %s202
          %208 = dma.hbm_to_vmem [thread:$0]  %s201, 256, %s203, %s192, 128, 128, 8
        $region28: #{tpu_custom_call.1} parent=19 // pred_fallthru
          _
        // Predicated region
        $region29: #{tpu_custom_call.1} parent=19 // pred_check
          %p209 = pneg %p113
        $region30: #{tpu_custom_call.1} parent=19 // pred_check_branch
          %211 = sbr.rel (%p209) target = $region32
        $region31: #{tpu_custom_call.1} parent=19 // pred_region
          %s212 = sand.u32 %s20, 1
          %s213 = scalar_lea.sflag [#allocation7], %s212
          %s214 = sand.u32 %s103, 1
          %s215 = smul.addr %s214, 16
          %s216 = scalar_lea.vmem [#allocation8], %s215
          %s217 = smul.u32 2, %s20
          %s219 = ssub.s32 256, 256
          %220 = vsyncadd %s213, %s219
          %s221 = smul.addr %s217, 128
          %s222 = scalar_lea.hbm %s3, %s221
          %s223 = sshll.u32 %s216, 4
          %s224 = int_to_ptr.vmem [resolvable:$true] %s223
          %229 = dma.hbm_to_vmem [thread:$0]  %s222, 256, %s224, %s213, 128, 128, 8
        $region32: #{tpu_custom_call.1} parent=19 // pred_fallthru
          _
      $region20: #{tpu_custom_call.1} parent=5 // pred_fallthru
        _
      %p230 = scmp.le.s32.totalorder 1, %s20
      %p231 = scmp.lt.s32.totalorder %s20, 3
      %p232 = pnand %p230, %p231
      %p233 = pneg %p232
      // Predicated region
      $region33: #{tpu_custom_call.1} parent=5 // pred_check
        _
      $region34: #{tpu_custom_call.1} parent=5 // pred_check_branch
        %235 = sbr.rel (%p232) target = $region36
      $region35: #{tpu_custom_call.1} parent=5 // pred_region
        %s236 = ssub.s32 %s20, 1
        %s237 = sand.u32 %s54, 1
        %s238 = scalar_lea.sflag [#allocation4], %s237
        %s239 = sand.u32 %s54, 1
        %s240 = smul.addr %s239, 16
        %s241 = scalar_lea.vmem [#allocation3], %s240
        // Predicated region
        $region37: #{tpu_custom_call.1} parent=35 // pred_check
          %p242 = pneg %p67
        $region38: #{tpu_custom_call.1} parent=35 // pred_check_branch
          %244 = sbr.rel (%p242) target = $region40
        $region39: #{tpu_custom_call.1} parent=35 // pred_region
          %245 = dma.done %s238, 256
        $region40: #{tpu_custom_call.1} parent=35 // pred_fallthru
          _
        %s246 = sand.u32 %s25, 1
        %s247 = scalar_lea.sflag [#allocation7], %s246
        %s248 = sand.u32 %s80, 1
        %s249 = smul.addr %s248, 16
        %s250 = scalar_lea.vmem [#allocation6], %s249
        // Predicated region
        $region41: #{tpu_custom_call.1} parent=35 // pred_check
          %p251 = pneg %p93
        $region42: #{tpu_custom_call.1} parent=35 // pred_check_branch
          %253 = sbr.rel (%p251) target = $region44
        $region43: #{tpu_custom_call.1} parent=35 // pred_region
          %254 = dma.done %s247, 256
        $region44: #{tpu_custom_call.1} parent=35 // pred_fallthru
          _
        %s255 = sand.u32 %s25, 1
        %s256 = scalar_lea.sflag [#allocation7], %s255
        %s257 = sand.u32 %s106, 1
        %s258 = smul.addr %s257, 16
        %s259 = scalar_lea.vmem [#allocation8], %s258
        // Predicated region
        $region45: #{tpu_custom_call.1} parent=35 // pred_check
          %p260 = pneg %p119
        $region46: #{tpu_custom_call.1} parent=35 // pred_check_branch
          %262 = sbr.rel (%p260) target = $region48
        $region47: #{tpu_custom_call.1} parent=35 // pred_region
          %263 = dma.done %s256, 256
        $region48: #{tpu_custom_call.1} parent=35 // pred_fallthru
          _
        %p264 = pneg %p41
        %p265 = pneg %p38
        %s266 = sand.u32 %s54, 1
        %s267 = scalar_lea.sflag [#allocation4], %s266
        %s268 = sand.u32 %s54, 1
        %s269 = smul.addr %s268, 16
        %s270 = scalar_lea.vmem [#allocation3], %s269
        %p271 = pneg %p67
        %p272 = pneg %p64
        %s273 = sand.u32 %s25, 1
        %s274 = scalar_lea.sflag [#allocation7], %s273
        %s275 = sand.u32 %s80, 1
        %s276 = smul.addr %s275, 16
        %s277 = scalar_lea.vmem [#allocation6], %s276
        %p278 = pneg %p93
        %p279 = pneg %p90
        %s280 = sand.u32 %s25, 1
        %s281 = scalar_lea.sflag [#allocation7], %s280
        %s282 = sand.u32 %s106, 1
        %s283 = smul.addr %s282, 16
        %s284 = scalar_lea.vmem [#allocation8], %s283
        %p285 = pneg %p119
        %p286 = pneg %p116
        %p287 = pneg %p145
        %p288 = pneg %p142
        %s289 = sand.u32 %s132, 1
        %s290 = scalar_lea.sflag [#allocation5], %s289
        %s291 = sand.u32 %s132, 1
        %s292 = smul.addr %s291, 16
        %s293 = scalar_lea.vmem [#allocation9], %s292
        %s294 = smul.u32 2, %s25
        %s295 = smul.u32 2, %s25
        %s296 = smul.u32 2, %s25
        %s297 = smul.u32 2, %s25
        %v298 = vld [vmem:[%s241] sm:$0xff]
        %v299 = vld [vmem:[%s241 + $0x8] sm:$0xff]
        %v300 = vld [vmem:[%s250] sm:$0xff]
        %v301 = vld [vmem:[%s250 + $0x8] sm:$0xff]
        %v302 = vld [vmem:[%s259] sm:$0xff]
        %v303 = vld [vmem:[%s259 + $0x8] sm:$0xff]
        %v304 = vmul.f32 %v300, %v300
        %v305 = vmul.f32 %v301, %v301
        %vm306 = vcmask 261120
        %v307 = vsel %vm306, %v304, 0.0
        %308 = vadd.xlane.f32.xlu0 %v307
        %v309 = vpop.xlane.xlu0 %308
        %v310 = vsel %vm306, %v305, 0.0
        %311 = vadd.xlane.f32.xlu0 %v310
        %v312 = vpop.xlane.xlu0 %311
        %v313 = vrsqrt.pop %v309
        %v314 = vmul.f32 %v309, %v313
        %vm315 = vcmp.eq.f32.partialorder %v309, inf
        %v316 = vsel %vm315, %v309, %v314
        %vm317 = vcmp.eq.f32.partialorder %v309, 0.0
        %v318 = vand.u32 %v309, 2147483648
        %v319 = vsel %vm317, %v318, %v316
        %v320 = vrsqrt.pop %v312
        %v321 = vmul.f32 %v312, %v320
        %vm322 = vcmp.eq.f32.partialorder %v312, inf
        %v323 = vsel %vm322, %v312, %v321
        %vm324 = vcmp.eq.f32.partialorder %v312, 0.0
        %v325 = vand.u32 %v312, 2147483648
        %v326 = vsel %vm324, %v325, %v323
        %v327 = vadd.f32 %v319, 1e-09
        %v328 = vadd.f32 %v326, 1e-09
        %v329 = vrcp.pop %v327
        %v330 = vmul.f32 1.0, %v329
        %v331 = vrcp.pop %v328
        %v332 = vmul.f32 1.0, %v331
        %v333 = vmul.f32 %v300, %v330
        %v334 = vmul.f32 %v301, %v332
        %335 = vxpose.xlu0.b32.start [1/16] %v333, 128
        %336 = vxpose.xlu0.b32.cont [2/16] 0.0, 128
        %337 = vxpose.xlu0.b32.cont [3/16] 0.0, 128
        %338 = vxpose.xlu0.b32.cont [4/16] 0.0, 128
        %339 = vxpose.xlu0.b32.cont [5/16] 0.0, 128
        %340 = vxpose.xlu0.b32.cont [6/16] 0.0, 128
        %341 = vxpose.xlu0.b32.cont [7/16] 0.0, 128
        %342 = vxpose.xlu0.b32.cont [8/16] 0.0, 128
        %343 = vxpose.xlu0.b32.cont [9/16] 0.0, 128
        %344 = vxpose.xlu0.b32.cont [10/16] 0.0, 128
        %345 = vxpose.xlu0.b32.cont [11/16] 0.0, 128
        %346 = vxpose.xlu0.b32.cont [12/16] 0.0, 128
        %347 = vxpose.xlu0.b32.cont [13/16] 0.0, 128
        %348 = vxpose.xlu0.b32.cont [14/16] 0.0, 128
        %349 = vxpose.xlu0.b32.cont [15/16] 0.0, 128
        %350 = vxpose.xlu0.b32.end [16/16] 0.0, 128
        %v351 = vpop.trf.xlu0
        %v352 = vpop.trf.xlu0
        %v353 = vpop.trf.xlu0
        %v354 = vpop.trf.xlu0
        %v355 = vpop.trf.xlu0
        %v356 = vpop.trf.xlu0
        %v357 = vpop.trf.xlu0
        %v358 = vpop.trf.xlu0
        %v359 = vpop.trf.xlu0
        %v360 = vpop.trf.xlu0
        %v361 = vpop.trf.xlu0
        %v362 = vpop.trf.xlu0
        %v363 = vpop.trf.xlu0
        %v364 = vpop.trf.xlu0
        %v365 = vpop.trf.xlu0
        %v366 = vpop.trf.xlu0
        %vm367 = vcmask 64512
        %v369 = vsel %vm367, %v351, 0
        %v372 = vsel %vm367, %v352, 0
        %v375 = vsel %vm367, %v353, 0
        %v378 = vsel %vm367, %v354, 0
        %380 = vmatprep.subr.mxu0 0.0
        %381 = vmatpush1.msra.mxu0 %v302
        %382 = vmatprep.subr.mxu0 0.0
        %383 = vmatpush1.msra.mxu0 0.0
        %384 = vmatprep.subr.mxu0 0.0
        %385 = vmatpush1.msra.mxu0 0.0
        %386 = vmatprep.subr.mxu0 0.0
        %387 = vmatpush1.msra.mxu0 0.0
        %388 = vmatprep.subr.mxu0 0.0
        %389 = vmatpush1.msra.mxu0 0.0
        %390 = vmatprep.subr.mxu0 0.0
        %391 = vmatpush1.msra.mxu0 0.0
        %392 = vmatprep.subr.mxu0 0.0
        %393 = vmatpush1.msra.mxu0 0.0
        %394 = vmatprep.subr.mxu0 0.0
        %395 = vmatpush1.msra.mxu0 0.0
        %396 = vmatprep.subr.mxu0 0.0
        %397 = vmatpush1.msra.mxu0 0.0
        %398 = vmatprep.subr.mxu0 0.0
        %399 = vmatpush1.msra.mxu0 0.0
        %400 = vmatprep.subr.mxu0 0.0
        %401 = vmatpush1.msra.mxu0 0.0
        %402 = vmatprep.subr.mxu0 0.0
        %403 = vmatpush1.msra.mxu0 0.0
        %404 = vmatprep.subr.mxu0 0.0
        %405 = vmatpush1.msra.mxu0 0.0
        %406 = vmatprep.subr.mxu0 0.0
        %407 = vmatpush1.msra.mxu0 0.0
        %408 = vmatprep.subr.mxu0 0.0
        %409 = vmatpush1.msra.mxu0 0.0
        %410 = vmatprep.subr.mxu0 0.0
        %411 = vmatpush1.msra.mxu0 0.0
        %412 = vmatprep.subr.mxu0 0.0
        %413 = vmatpush1.msra.mxu0 0.0
        %414 = vmatprep.subr.mxu0 0.0
        %415 = vmatpush1.msra.mxu0 0.0
        %416 = vmatprep.subr.mxu0 0.0
        %417 = vmatpush1.msra.mxu0 0.0
        %418 = vmatprep.subr.mxu0 0.0
        %419 = vmatpush1.msra.mxu0 0.0
        %420 = vmatprep.subr.mxu0 0.0
        %421 = vmatpush1.msra.mxu0 0.0
        %422 = vmatprep.subr.mxu0 0.0
        %423 = vmatpush1.msra.mxu0 0.0
        %424 = vmatprep.subr.mxu0 0.0
        %425 = vmatpush1.msra.mxu0 0.0
        %426 = vmatprep.subr.mxu0 0.0
        %427 = vmatpush1.msra.mxu0 0.0
        %428 = vmatprep.subr.mxu0 0.0
        %429 = vmatpush1.msra.mxu0 0.0
        %430 = vmatprep.subr.mxu0 0.0
        %431 = vmatpush1.msra.mxu0 0.0
        %432 = vmatprep.subr.mxu0 0.0
        %433 = vmatpush1.msra.mxu0 0.0
        %434 = vmatprep.subr.mxu0 0.0
        %435 = vmatpush1.msra.mxu0 0.0
        %436 = vmatprep.subr.mxu0 0.0
        %437 = vmatpush1.msra.mxu0 0.0
        %438 = vmatprep.subr.mxu0 0.0
        %439 = vmatpush1.msra.mxu0 0.0
        %440 = vmatprep.subr.mxu0 0.0
        %441 = vmatpush1.msra.mxu0 0.0
        %442 = vmatprep.subr.mxu0 0.0
        %443 = vmatpush1.msra.mxu0 0.0
        %444 = vmatprep.mubr.f32.mxu0 0.0
        %445 = vmatmul.mubr.f32.gmra.mrb[0].mxu0 %v369
        %v446 = vpop.f32.mrb[0].mxu0
        %v447 = vadd.f32 0.0, %v446
        %v448 = vpop.f32.mrb[0].mxu0
        %449 = vmatprep.mubr.f32.mxu0 0.0
        %450 = vmatmul.mubr.f32.gmra.mrb[0].mxu0 %v372
        %v451 = vpop.f32.mrb[0].mxu0
        %v452 = vadd.f32 0.0, %v451
        %v453 = vpop.f32.mrb[0].mxu0
        %454 = vmatprep.mubr.f32.mxu0 0.0
        %455 = vmatmul.mubr.f32.gmra.mrb[0].mxu0 %v375
        %v456 = vpop.f32.mrb[0].mxu0
        %v457 = vadd.f32 0.0, %v456
        %v458 = vpop.f32.mrb[0].mxu0
        %459 = vmatprep.mubr.f32.mxu0 0.0
        %460 = vmatmul.mubr.f32.gmra.mrb[0].mxu0 %v378
        %v461 = vpop.f32.mrb[0].mxu0
        %v462 = vadd.f32 0.0, %v461
        %v463 = vpop.f32.mrb[0].mxu0
        %464 = vdwg.mxu0
        %465 = vxpose.xlu0.b32.start [1/16] %v334, 128
        %466 = vxpose.xlu0.b32.cont [2/16] 0.0, 128
        %467 = vxpose.xlu0.b32.cont [3/16] 0.0, 128
        %468 = vxpose.xlu0.b32.cont [4/16] 0.0, 128
        %469 = vxpose.xlu0.b32.cont [5/16] 0.0, 128
        %470 = vxpose.xlu0.b32.cont [6/16] 0.0, 128
        %471 = vxpose.xlu0.b32.cont [7/16] 0.0, 128
        %472 = vxpose.xlu0.b32.cont [8/16] 0.0, 128
        %473 = vxpose.xlu0.b32.cont [9/16] 0.0, 128
        %474 = vxpose.xlu0.b32.cont [10/16] 0.0, 128
        %475 = vxpose.xlu0.b32.cont [11/16] 0.0, 128
        %476 = vxpose.xlu0.b32.cont [12/16] 0.0, 128
        %477 = vxpose.xlu0.b32.cont [13/16] 0.0, 128
        %478 = vxpose.xlu0.b32.cont [14/16] 0.0, 128
        %479 = vxpose.xlu0.b32.cont [15/16] 0.0, 128
        %480 = vxpose.xlu0.b32.end [16/16] 0.0, 128
        %v481 = vpop.trf.xlu0
        %v482 = vpop.trf.xlu0
        %v483 = vpop.trf.xlu0
        %v484 = vpop.trf.xlu0
        %v485 = vpop.trf.xlu0
        %v486 = vpop.trf.xlu0
        %v487 = vpop.trf.xlu0
        %v488 = vpop.trf.xlu0
        %v489 = vpop.trf.xlu0
        %v490 = vpop.trf.xlu0
        %v491 = vpop.trf.xlu0
        %v492 = vpop.trf.xlu0
        %v493 = vpop.trf.xlu0
        %v494 = vpop.trf.xlu0
        %v495 = vpop.trf.xlu0
        %v496 = vpop.trf.xlu0
        %v498 = vsel %vm367, %v481, 0
        %v501 = vsel %vm367, %v482, 0
        %v504 = vsel %vm367, %v483, 0
        %v507 = vsel %vm367, %v484, 0
        %509 = vmatprep.subr.mxu0 0.0
        %510 = vmatpush1.msra.mxu0 %v303
        %511 = vmatprep.subr.mxu0 0.0
        %512 = vmatpush1.msra.mxu0 0.0
        %513 = vmatprep.subr.mxu0 0.0
        %514 = vmatpush1.msra.mxu0 0.0
        %515 = vmatprep.subr.mxu0 0.0
        %516 = vmatpush1.msra.mxu0 0.0
        %517 = vmatprep.subr.mxu0 0.0
        %518 = vmatpush1.msra.mxu0 0.0
        %519 = vmatprep.subr.mxu0 0.0
        %520 = vmatpush1.msra.mxu0 0.0
        %521 = vmatprep.subr.mxu0 0.0
        %522 = vmatpush1.msra.mxu0 0.0
        %523 = vmatprep.subr.mxu0 0.0
        %524 = vmatpush1.msra.mxu0 0.0
        %525 = vmatprep.subr.mxu0 0.0
        %526 = vmatpush1.msra.mxu0 0.0
        %527 = vmatprep.subr.mxu0 0.0
        %528 = vmatpush1.msra.mxu0 0.0
        %529 = vmatprep.subr.mxu0 0.0
        %530 = vmatpush1.msra.mxu0 0.0
        %531 = vmatprep.subr.mxu0 0.0
        %532 = vmatpush1.msra.mxu0 0.0
        %533 = vmatprep.subr.mxu0 0.0
        %534 = vmatpush1.msra.mxu0 0.0
        %535 = vmatprep.subr.mxu0 0.0
        %536 = vmatpush1.msra.mxu0 0.0
        %537 = vmatprep.subr.mxu0 0.0
        %538 = vmatpush1.msra.mxu0 0.0
        %539 = vmatprep.subr.mxu0 0.0
        %540 = vmatpush1.msra.mxu0 0.0
        %541 = vmatprep.subr.mxu0 0.0
        %542 = vmatpush1.msra.mxu0 0.0
        %543 = vmatprep.subr.mxu0 0.0
        %544 = vmatpush1.msra.mxu0 0.0
        %545 = vmatprep.subr.mxu0 0.0
        %546 = vmatpush1.msra.mxu0 0.0
        %547 = vmatprep.subr.mxu0 0.0
        %548 = vmatpush1.msra.mxu0 0.0
        %549 = vmatprep.subr.mxu0 0.0
        %550 = vmatpush1.msra.mxu0 0.0
        %551 = vmatprep.subr.mxu0 0.0
        %552 = vmatpush1.msra.mxu0 0.0
        %553 = vmatprep.subr.mxu0 0.0
        %554 = vmatpush1.msra.mxu0 0.0
        %555 = vmatprep.subr.mxu0 0.0
        %556 = vmatpush1.msra.mxu0 0.0
        %557 = vmatprep.subr.mxu0 0.0
        %558 = vmatpush1.msra.mxu0 0.0
        %559 = vmatprep.subr.mxu0 0.0
        %560 = vmatpush1.msra.mxu0 0.0
        %561 = vmatprep.subr.mxu0 0.0
        %562 = vmatpush1.msra.mxu0 0.0
        %563 = vmatprep.subr.mxu0 0.0
        %564 = vmatpush1.msra.mxu0 0.0
        %565 = vmatprep.subr.mxu0 0.0
        %566 = vmatpush1.msra.mxu0 0.0
        %567 = vmatprep.subr.mxu0 0.0
        %568 = vmatpush1.msra.mxu0 0.0
        %569 = vmatprep.subr.mxu0 0.0
        %570 = vmatpush1.msra.mxu0 0.0
        %571 = vmatprep.subr.mxu0 0.0
        %572 = vmatpush1.msra.mxu0 0.0
        %573 = vmatprep.mubr.f32.mxu0 0.0
        %574 = vmatmul.mubr.f32.gmra.mrb[0].mxu0 %v498
        %v575 = vpop.f32.mrb[0].mxu0
        %v576 = vadd.f32 0.0, %v575
        %v577 = vpop.f32.mrb[0].mxu0
        %578 = vmatprep.mubr.f32.mxu0 0.0
        %579 = vmatmul.mubr.f32.gmra.mrb[0].mxu0 %v501
        %v580 = vpop.f32.mrb[0].mxu0
        %v581 = vadd.f32 0.0, %v580
        %v582 = vpop.f32.mrb[0].mxu0
        %583 = vmatprep.mubr.f32.mxu0 0.0
        %584 = vmatmul.mubr.f32.gmra.mrb[0].mxu0 %v504
        %v585 = vpop.f32.mrb[0].mxu0
        %v586 = vadd.f32 0.0, %v585
        %v587 = vpop.f32.mrb[0].mxu0
        %588 = vmatprep.mubr.f32.mxu0 0.0
        %589 = vmatmul.mubr.f32.gmra.mrb[0].mxu0 %v507
        %v590 = vpop.f32.mrb[0].mxu0
        %v591 = vadd.f32 0.0, %v590
        %v592 = vpop.f32.mrb[0].mxu0
        %593 = vdwg.mxu0
        %s594 = sld [smem:[#allocation2]]
        %v595 = vstv %s594
        %v596 = vmul.f32 %v298, %v595
        %v597 = vmul.f32 %v299, %v595
        %v599 = vsel %vm306, %v596, 0
        %601 = vmatprep.subr.mxu0 0.0
        %602 = vmatpush1.msra.mxu0 %v447
        %603 = vmatprep.subr.mxu0 0.0
        %604 = vmatpush1.msra.mxu0 %v452
        %605 = vmatprep.subr.mxu0 0.0
        %606 = vmatpush1.msra.mxu0 %v457
        %607 = vmatprep.subr.mxu0 0.0
        %608 = vmatpush1.msra.mxu0 %v462
        %609 = vmatprep.subr.mxu0 0.0
        %610 = vmatpush1.msra.mxu0 0.0
        %611 = vmatprep.subr.mxu0 0.0
        %612 = vmatpush1.msra.mxu0 0.0
        %613 = vmatprep.subr.mxu0 0.0
        %614 = vmatpush1.msra.mxu0 0.0
        %615 = vmatprep.subr.mxu0 0.0
        %616 = vmatpush1.msra.mxu0 0.0
        %617 = vmatprep.subr.mxu0 0.0
        %618 = vmatpush1.msra.mxu0 0.0
        %619 = vmatprep.subr.mxu0 0.0
        %620 = vmatpush1.msra.mxu0 0.0
        %621 = vmatprep.subr.mxu0 0.0
        %622 = vmatpush1.msra.mxu0 0.0
        %623 = vmatprep.subr.mxu0 0.0
        %624 = vmatpush1.msra.mxu0 0.0
        %625 = vmatprep.subr.mxu0 0.0
        %626 = vmatpush1.msra.mxu0 0.0
        %627 = vmatprep.subr.mxu0 0.0
        %628 = vmatpush1.msra.mxu0 0.0
        %629 = vmatprep.subr.mxu0 0.0
        %630 = vmatpush1.msra.mxu0 0.0
        %631 = vmatprep.subr.mxu0 0.0
        %632 = vmatpush1.msra.mxu0 0.0
        %633 = vmatprep.subr.mxu0 0.0
        %634 = vmatpush1.msra.mxu0 0.0
        %635 = vmatprep.subr.mxu0 0.0
        %636 = vmatpush1.msra.mxu0 0.0
        %637 = vmatprep.subr.mxu0 0.0
        %638 = vmatpush1.msra.mxu0 0.0
        %639 = vmatprep.subr.mxu0 0.0
        %640 = vmatpush1.msra.mxu0 0.0
        %641 = vmatprep.subr.mxu0 0.0
        %642 = vmatpush1.msra.mxu0 0.0
        %643 = vmatprep.subr.mxu0 0.0
        %644 = vmatpush1.msra.mxu0 0.0
        %645 = vmatprep.subr.mxu0 0.0
        %646 = vmatpush1.msra.mxu0 0.0
        %647 = vmatprep.subr.mxu0 0.0
        %648 = vmatpush1.msra.mxu0 0.0
        %649 = vmatprep.subr.mxu0 0.0
        %650 = vmatpush1.msra.mxu0 0.0
        %651 = vmatprep.subr.mxu0 0.0
        %652 = vmatpush1.msra.mxu0 0.0
        %653 = vmatprep.subr.mxu0 0.0
        %654 = vmatpush1.msra.mxu0 0.0
        %655 = vmatprep.subr.mxu0 0.0
        %656 = vmatpush1.msra.mxu0 0.0
        %657 = vmatprep.subr.mxu0 0.0
        %658 = vmatpush1.msra.mxu0 0.0
        %659 = vmatprep.subr.mxu0 0.0
        %660 = vmatpush1.msra.mxu0 0.0
        %661 = vmatprep.subr.mxu0 0.0
        %662 = vmatpush1.msra.mxu0 0.0
        %663 = vmatprep.subr.mxu0 0.0
        %664 = vmatpush1.msra.mxu0 0.0
        %665 = vmatprep.mubr.f32.mxu0 0.0
        %666 = vmatmul.mubr.f32.gmra.mrb[0].mxu0 %v599
        %v667 = vpop.f32.mrb[0].mxu0
        %v668 = vadd.f32 0.0, %v667
        %v669 = vpop.f32.mrb[0].mxu0
        %670 = vdwg.mxu0
        %v672 = vsel %vm306, %v597, 0
        %674 = vmatprep.subr.mxu0 0.0
        %675 = vmatpush1.msra.mxu0 %v576
        %676 = vmatprep.subr.mxu0 0.0
        %677 = vmatpush1.msra.mxu0 %v581
        %678 = vmatprep.subr.mxu0 0.0
        %679 = vmatpush1.msra.mxu0 %v586
        %680 = vmatprep.subr.mxu0 0.0
        %681 = vmatpush1.msra.mxu0 %v591
        %682 = vmatprep.subr.mxu0 0.0
        %683 = vmatpush1.msra.mxu0 0.0
        %684 = vmatprep.subr.mxu0 0.0
        %685 = vmatpush1.msra.mxu0 0.0
        %686 = vmatprep.subr.mxu0 0.0
        %687 = vmatpush1.msra.mxu0 0.0
        %688 = vmatprep.subr.mxu0 0.0
        %689 = vmatpush1.msra.mxu0 0.0
        %690 = vmatprep.subr.mxu0 0.0
        %691 = vmatpush1.msra.mxu0 0.0
        %692 = vmatprep.subr.mxu0 0.0
        %693 = vmatpush1.msra.mxu0 0.0
        %694 = vmatprep.subr.mxu0 0.0
        %695 = vmatpush1.msra.mxu0 0.0
        %696 = vmatprep.subr.mxu0 0.0
        %697 = vmatpush1.msra.mxu0 0.0
        %698 = vmatprep.subr.mxu0 0.0
        %699 = vmatpush1.msra.mxu0 0.0
        %700 = vmatprep.subr.mxu0 0.0
        %701 = vmatpush1.msra.mxu0 0.0
        %702 = vmatprep.subr.mxu0 0.0
        %703 = vmatpush1.msra.mxu0 0.0
        %704 = vmatprep.subr.mxu0 0.0
        %705 = vmatpush1.msra.mxu0 0.0
        %706 = vmatprep.subr.mxu0 0.0
        %707 = vmatpush1.msra.mxu0 0.0
        %708 = vmatprep.subr.mxu0 0.0
        %709 = vmatpush1.msra.mxu0 0.0
        %710 = vmatprep.subr.mxu0 0.0
        %711 = vmatpush1.msra.mxu0 0.0
        %712 = vmatprep.subr.mxu0 0.0
        %713 = vmatpush1.msra.mxu0 0.0
        %714 = vmatprep.subr.mxu0 0.0
        %715 = vmatpush1.msra.mxu0 0.0
        %716 = vmatprep.subr.mxu0 0.0
        %717 = vmatpush1.msra.mxu0 0.0
        %718 = vmatprep.subr.mxu0 0.0
        %719 = vmatpush1.msra.mxu0 0.0
        %720 = vmatprep.subr.mxu0 0.0
        %721 = vmatpush1.msra.mxu0 0.0
        %722 = vmatprep.subr.mxu0 0.0
        %723 = vmatpush1.msra.mxu0 0.0
        %724 = vmatprep.subr.mxu0 0.0
        %725 = vmatpush1.msra.mxu0 0.0
        %726 = vmatprep.subr.mxu0 0.0
        %727 = vmatpush1.msra.mxu0 0.0
        %728 = vmatprep.subr.mxu0 0.0
        %729 = vmatpush1.msra.mxu0 0.0
        %730 = vmatprep.subr.mxu0 0.0
        %731 = vmatpush1.msra.mxu0 0.0
        %732 = vmatprep.subr.mxu0 0.0
        %733 = vmatpush1.msra.mxu0 0.0
        %734 = vmatprep.subr.mxu0 0.0
        %735 = vmatpush1.msra.mxu0 0.0
        %736 = vmatprep.subr.mxu0 0.0
        %737 = vmatpush1.msra.mxu0 0.0
        %738 = vmatprep.mubr.f32.mxu0 0.0
        %739 = vmatmul.mubr.f32.gmra.mrb[0].mxu0 %v672
        %v740 = vpop.f32.mrb[0].mxu0
        %v741 = vadd.f32 0.0, %v740
        %v742 = vpop.f32.mrb[0].mxu0
        %743 = vdwg.mxu0
        %744 = vst.msk [vmem:[%s293] sm:$0xff] %vm306, %v668
        %745 = vst.msk [vmem:[%s293 + $0x8] sm:$0xff] %vm306, %v741
        %s746 = sand.u32 %s132, 1
        %s747 = scalar_lea.sflag [#allocation5], %s746
        %s748 = sand.u32 %s132, 1
        %s749 = smul.addr %s748, 16
        %s750 = scalar_lea.vmem [#allocation9], %s749
        // Predicated region
        $region49: #{tpu_custom_call.1} parent=35 // pred_check
          %p751 = pneg %p142
        $region50: #{tpu_custom_call.1} parent=35 // pred_check_branch
          %753 = sbr.rel (%p751) target = $region52
        $region51: #{tpu_custom_call.1} parent=35 // pred_region
          %s754 = smul.u32 2, %s25
          %s756 = ssub.s32 256, 256
          %757 = vsyncadd %s747, %s756
          %s758 = smul.addr %s754, 128
          %s759 = scalar_lea.hbm %s4, %s758
          %s760 = sshll.u32 %s750, 4
          %s761 = int_to_ptr.vmem [resolvable:$true] %s760
          %766 = dma.vmem_to_hbm [thread:$0]  %s761, 256, %s759, %s747, 128, 128, 8
        $region52: #{tpu_custom_call.1} parent=35 // pred_fallthru
          _
      $region36: #{tpu_custom_call.1} parent=5 // pred_fallthru
        _
      %p767 = scmp.le.s32.totalorder 2, %s20
      // Predicated region
      $region53: #{tpu_custom_call.1} parent=5 // pred_check
        %p768 = pneg %p767
      $region54: #{tpu_custom_call.1} parent=5 // pred_check_branch
        %770 = sbr.rel (%p768) target = $region56
      $region55: #{tpu_custom_call.1} parent=5 // pred_region
        %s771 = ssub.s32 %s20, 2
        // Predicated region
        $region57: #{tpu_custom_call.1} parent=55 // pred_check
          %p772 = pneg %p148
        $region58: #{tpu_custom_call.1} parent=55 // pred_check_branch
          %774 = sbr.rel (%p772) target = $region60
        $region59: #{tpu_custom_call.1} parent=55 // pred_region
          %s775 = sand.u32 %s133, 1
          %s776 = scalar_lea.sflag [#allocation5], %s775
          %s777 = sand.u32 %s133, 1
          %s778 = smul.addr %s777, 16
          %s779 = scalar_lea.vmem [#allocation9], %s778
          %780 = dma.done %s776, 256
        $region60: #{tpu_custom_call.1} parent=55 // pred_fallthru
          _
      $region56: #{tpu_custom_call.1} parent=5 // pred_fallthru
        _
    $region6: #{tpu_custom_call.1} parent=1 // loop_footer
      %s24 = sadd.s32 1, %s20
    $region7: #{tpu_custom_call.1} parent=1 // loop_footer_branch
      %19 = sbr.rel target = $region3
    $region8: #{tpu_custom_call.1} parent=1 // loop_exit
      _
    %781 = vsyncpa [#allocation4], 1
    %s782 = scalar_lea.sflag [#allocation4], 1
    %783 = vsyncpa %s782, 1
    %784 = vsyncpa [#allocation7], 1
    %s785 = scalar_lea.sflag [#allocation7], 1
    %786 = vsyncpa %s785, 1
    %787 = vsyncpa [#allocation5], 1
    %s788 = scalar_lea.sflag [#allocation5], 1
    %789 = vsyncpa %s788, 1

</llo_original>
